<compile_context>
chip_gen: v7x
topology: tpu7x:2x2x1
jax: 0.10.0
libtpu: 0.0.40
codegen_flags: <defaults>
</compile_context>

<pallas_src>
import jax
import jax.numpy as jnp
from jax.experimental import pallas as pl
from jax.experimental.pallas import tpu as pltpu

VOCA_SIZE = 50
EMBED_SIZE = 16
MAX_LENGTH = 8          # -> Lc = 4, Lp = 1, fc_in = 100
OUT_CHANNELS = 100
KH = 5                  # conv kernel height
POOL = 4                # max_pool window (4, 1)
NUM_CLASSES = 2
LANE = 128              # TPU lane width


def _round_up(x, m):
    return ((x + m - 1) // m) * m


def _cnn_kernel(tok_ref, emb_ref, wconv_ref, bconv_ref, wfc_ref, bfc_ref, out_ref):
    """Fused embedding + conv(as matmul) + ReLU + maxpool + FC.

    tok_ref  : (B*L, 1)   int32  flattened token ids
    emb_ref  : (VP, E)    f32    embedding table, vocab zero-padded to VP=128
    wconv_ref: (KP, CP)   f32    conv weight, rows in (dt, e) order, zero-padded to 128x128
    bconv_ref: (1, CP)    f32
    wfc_ref  : (Lp*CP, 2) f32    fc weight pre-permuted to (pool_pos, channel) row order
    bfc_ref  : (1, 2)     f32
    out_ref  : (B, 2)     f32
    """
    BL = tok_ref.shape[0]
    VP, E = emb_ref.shape
    KP, CP = wconv_ref.shape
    B = out_ref.shape[0]
    L = BL // B
    Lc = L - (KH - 1)
    Lp = Lc // POOL

    # 1) Embedding gather as a one-hot MXU matmul (exact: one-hot entries are 0/1).
    ids = tok_ref[...]                                              # (BL, 1) i32
    iota = jax.lax.broadcasted_iota(jnp.int32, (BL, VP), 1)
    onehot = (iota == ids).astype(jnp.float32)                      # (BL, VP)
    emb = jnp.dot(onehot, emb_ref[...],
                  preferred_element_type=jnp.float32)               # (BL, E)

    # 2) im2col built ONCE for the whole batch: row r holds the KH embedding rows
    #    starting at token r.  Rows whose window crosses a sample boundary are
    #    computed against zero padding and discarded after the conv.
    emb_ext = jnp.concatenate(
        [emb, jnp.zeros((KH - 1, E), jnp.float32)], axis=0)         # (BL+KH-1, E)
    parts = [emb_ext[dt:dt + BL, :] for dt in range(KH)]            # KH x (BL, E)
    if KP > KH * E:
        parts.append(jnp.zeros((BL, KP - KH * E), jnp.float32))     # lane-pad to KP
    windows = jnp.concatenate(parts, axis=-1)                       # (BL, KP)

    # 3) Conv as a single MXU matmul + bias + ReLU.
    conv = jnp.dot(windows, wconv_ref[...],
                   preferred_element_type=jnp.float32)              # (BL, CP)
    conv = jnp.maximum(conv + bconv_ref[...], 0.0)

    # 4) MaxPool (POOL, 1): keep the Lc valid rows per sample, pool groups of POOL
    #    rows.  (PyTorch MaxPool2d truncates the tail when Lc % POOL != 0.)
    #    The second ReLU is a mathematical no-op on ReLU'd values and is dropped.
    conv3 = conv.reshape(B, L, CP)[:, :Lp * POOL, :]                # (B, Lp*POOL, CP)
    pooled = conv3.reshape(B * Lp, POOL, CP).max(axis=1)            # (B*Lp, CP)

    # 5) Single FC matmul; PyTorch's channel-major .view() is folded into the
    #    pre-permuted wfc layout built in the wrapper.
    flat = pooled.reshape(B, Lp * CP)                               # (B, Lp*CP)
    out_ref[...] = (jnp.dot(flat, wfc_ref[...],
                            preferred_element_type=jnp.float32)
                    + bfc_ref[...])


@jax.jit
def model_forward(tokens, emb_table, w_conv, b_conv, w_fc, b_fc):
    """tokens: (B, L) int32.  Returns logits (B, 2) float32."""
    B, L = tokens.shape
    V, E = emb_table.shape
    Lc = L - (KH - 1)
    Lp = Lc // POOL
    VP = _round_up(V, LANE)
    KP = _round_up(KH * E, LANE)
    CP = _round_up(OUT_CHANNELS, LANE)

    tok2d = tokens.reshape(B * L, 1).astype(jnp.int32)

    emb_pad = jnp.pad(emb_table.astype(jnp.float32), ((0, VP - V), (0, 0)))

    # Conv weight (100, 1, 5, E) -> (5*E, 100), row order (dt, e) -> zero-pad to (KP, CP).
    wconv_flat = w_conv.reshape(OUT_CHANNELS, KH * E).T.astype(jnp.float32)
    wconv_pad = jnp.pad(wconv_flat, ((0, KP - KH * E), (0, CP - OUT_CHANNELS)))
    bconv_pad = jnp.pad(b_conv.astype(jnp.float32).reshape(1, OUT_CHANNELS),
                        ((0, 0), (0, CP - OUT_CHANNELS)))

    # Torch fc weight (2, 100*Lp), feature index o*Lp + p
    #   -> (Lp, 100, 2) -> channel-pad -> (Lp*CP, 2) matching the kernel's (p, c) flatten.
    wfc_perm = w_fc.astype(jnp.float32).reshape(NUM_CLASSES, OUT_CHANNELS, Lp)
    wfc_perm = wfc_perm.transpose(2, 1, 0)                           # (Lp, 100, 2)
    wfc_pad = jnp.pad(wfc_perm, ((0, 0), (0, CP - OUT_CHANNELS), (0, 0)))
    wfc_pad = wfc_pad.reshape(Lp * CP, NUM_CLASSES)
    bfc2 = b_fc.astype(jnp.float32).reshape(1, NUM_CLASSES)

    vmem = pl.BlockSpec(memory_space=pltpu.MemorySpace.VMEM)
    # Gridless: the whole problem is a few KB of VMEM.  If batch scales, add a grid
    # over batch tiles with dimension_semantics=("parallel",) (v7x has 2 TensorCores).
    out = pl.pallas_call(
        _cnn_kernel,
        out_shape=jax.ShapeDtypeStruct((B, NUM_CLASSES), jnp.float32),
        in_specs=[vmem] * 6,
        out_specs=vmem,
    )(tok2d, emb_pad, wconv_pad, bconv_pad, wfc_pad, bfc2)
    return out


def reference_forward(tokens, emb_table, w_conv, b_conv, w_fc, b_fc):
    """Pure-JAX reference mirroring the PyTorch forward (eval mode)."""
    x = emb_table[tokens]                                # (B, L, E)
    B, L, E = x.shape
    Lc = L - (KH - 1)
    Lp = Lc // POOL
    windows = jnp.stack([x[:, dt:dt + Lc, :] for dt in range(KH)], axis=2)  # (B, Lc, 5, E)
    windows = windows.reshape(B, Lc, KH * E)
    conv = jnp.einsum('blf,of->bol', windows, w_conv.reshape(OUT_CHANNELS, KH * E))
    conv = conv + b_conv[None, :, None]                  # (B, 100, Lc)
    conv = jnp.maximum(conv, 0.0)
    pooled = conv[:, :, :Lp * POOL].reshape(B, OUT_CHANNELS, Lp, POOL).max(axis=-1)
    pooled = jnp.maximum(pooled, 0.0)                    # (B, 100, Lp)
    flat = pooled.reshape(B, OUT_CHANNELS * Lp)          # channel-major, like .view()
    return flat @ w_fc.T + b_fc


if __name__ == "__main__":
    key = jax.random.PRNGKey(0)
    k_tok, k_emb, k_wc, k_bc, k_wf, k_bf = jax.random.split(key, 6)

    B, L, E = 2, MAX_LENGTH, EMBED_SIZE
    Lp = (L - (KH - 1)) // POOL
    fc_in = OUT_CHANNELS * Lp

    tokens = jax.random.randint(k_tok, (B, L), 0, VOCA_SIZE, dtype=jnp.int32)
    emb_table = jax.random.normal(k_emb, (VOCA_SIZE, E), dtype=jnp.float32)
    w_conv = jax.random.normal(k_wc, (OUT_CHANNELS, 1, KH, E), dtype=jnp.float32) * 0.05
    b_conv = jax.random.normal(k_bc, (OUT_CHANNELS,), dtype=jnp.float32) * 0.05
    w_fc = jax.random.normal(k_wf, (NUM_CLASSES, fc_in), dtype=jnp.float32) * 0.05
    b_fc = jax.random.normal(k_bf, (NUM_CLASSES,), dtype=jnp.float32) * 0.05

    out = model_forward(tokens, emb_table, w_conv, b_conv, w_fc, b_fc)
    out = jax.block_until_ready(out)

    ref = reference_forward(tokens, emb_table, w_conv, b_conv, w_fc, b_fc)
    assert out.shape == (B, NUM_CLASSES)
    assert jnp.allclose(out, ref, atol=1e-4, rtol=1e-4), (out, ref)

    print("KERNEL_OK")
</pallas_src>

<mosaic_0001>
module attributes {stable_mosaic.version = 11 : i64} {
  func.func @_cnn_kernel(%arg0: memref<16x1xi32, #tpu.memory_space<vmem>>, %arg1: memref<128x16xf32, #tpu.memory_space<vmem>>, %arg2: memref<128x128xf32, #tpu.memory_space<vmem>>, %arg3: memref<1x128xf32, #tpu.memory_space<vmem>>, %arg4: memref<128x2xf32, #tpu.memory_space<vmem>>, %arg5: memref<1x2xf32, #tpu.memory_space<vmem>>, %arg6: memref<2x2xf32, #tpu.memory_space<vmem>>) attributes {dimension_semantics = [], scalar_prefetch = 0 : i64, scratch_operands = 0 : i64, tpu.core_type = #tpu.core_type<tc>} {
    %c0 = arith.constant 0 : index
    %c0_0 = arith.constant 0 : index
    %0 = vector.load %arg0[%c0, %c0_0] : memref<16x1xi32, #tpu.memory_space<vmem>>, vector<16x1xi32>
    %1 = tpu.iota {dimensions = array<i32: 1>} : vector<16x128xi32>
    %2 = vector.broadcast %0 : vector<16x1xi32> to vector<16x128xi32>
    %3 = arith.cmpi eq, %1, %2 : vector<16x128xi32>
    %4 = arith.extui %3 : vector<16x128xi1> to vector<16x128xi32>
    %5 = arith.sitofp %4 : vector<16x128xi32> to vector<16x128xf32>
    %c0_1 = arith.constant 0 : index
    %c0_2 = arith.constant 0 : index
    %6 = vector.load %arg1[%c0_1, %c0_2] : memref<128x16xf32, #tpu.memory_space<vmem>>, vector<128x16xf32>
    %cst = arith.constant dense<0.000000e+00> : vector<16x16xf32>
    %7 = tpu.matmul %5, %6, %cst {dimension_numbers = #tpu.dot_dimension_numbers<[1], [0], [0], [1], [0, 0, 1, 1], [], []>} : vector<16x128xf32>, vector<128x16xf32>, vector<16x16xf32> -> vector<16x16xf32>
    %cst_3 = arith.constant 0.000000e+00 : f32
    %8 = vector.broadcast %cst_3 : f32 to vector<4x16xf32>
    %9 = tpu.concatenate %7, %8 in 0 : vector<16x16xf32>, vector<4x16xf32> -> vector<20x16xf32>
    %10 = vector.extract_strided_slice %9 {offsets = [0, 0], sizes = [16, 16], strides = [1, 1]} : vector<20x16xf32> to vector<16x16xf32>
    %11 = vector.extract_strided_slice %9 {offsets = [1, 0], sizes = [16, 16], strides = [1, 1]} : vector<20x16xf32> to vector<16x16xf32>
    %12 = vector.extract_strided_slice %9 {offsets = [2, 0], sizes = [16, 16], strides = [1, 1]} : vector<20x16xf32> to vector<16x16xf32>
    %13 = vector.extract_strided_slice %9 {offsets = [3, 0], sizes = [16, 16], strides = [1, 1]} : vector<20x16xf32> to vector<16x16xf32>
    %14 = vector.extract_strided_slice %9 {offsets = [4, 0], sizes = [16, 16], strides = [1, 1]} : vector<20x16xf32> to vector<16x16xf32>
    %cst_4 = arith.constant 0.000000e+00 : f32
    %15 = vector.broadcast %cst_4 : f32 to vector<16x48xf32>
    %16 = tpu.concatenate %10, %11, %12, %13, %14, %15 in 1 : vector<16x16xf32>, vector<16x16xf32>, vector<16x16xf32>, vector<16x16xf32>, vector<16x16xf32>, vector<16x48xf32> -> vector<16x128xf32>
    %c0_5 = arith.constant 0 : index
    %c0_6 = arith.constant 0 : index
    %17 = vector.load %arg2[%c0_5, %c0_6] : memref<128x128xf32, #tpu.memory_space<vmem>>, vector<128x128xf32>
    %cst_7 = arith.constant dense<0.000000e+00> : vector<16x128xf32>
    %18 = tpu.matmul %16, %17, %cst_7 {dimension_numbers = #tpu.dot_dimension_numbers<[1], [0], [0], [1], [0, 0, 1, 1], [], []>} : vector<16x128xf32>, vector<128x128xf32>, vector<16x128xf32> -> vector<16x128xf32>
    %c0_8 = arith.constant 0 : index
    %c0_9 = arith.constant 0 : index
    %19 = vector.load %arg3[%c0_8, %c0_9] : memref<1x128xf32, #tpu.memory_space<vmem>>, vector<1x128xf32>
    %20 = vector.broadcast %19 : vector<1x128xf32> to vector<16x128xf32>
    %21 = arith.addf %18, %20 : vector<16x128xf32>
    %cst_10 = arith.constant 0.000000e+00 : f32
    %22 = vector.broadcast %cst_10 : f32 to vector<16x128xf32>
    %23 = arith.maximumf %21, %22 : vector<16x128xf32>
    %24 = vector.shape_cast %23 : vector<16x128xf32> to vector<2x8x128xf32>
    %25 = vector.extract_strided_slice %24 {offsets = [0, 0, 0], sizes = [2, 4, 128], strides = [1, 1, 1]} : vector<2x8x128xf32> to vector<2x4x128xf32>
    %cst_11 = arith.constant dense<0xFF800000> : vector<2x128xf32>
    %26 = vector.multi_reduction <maximumf>, %25, %cst_11 [1] : vector<2x4x128xf32> to vector<2x128xf32>
    %c0_12 = arith.constant 0 : index
    %c0_13 = arith.constant 0 : index
    %27 = vector.load %arg4[%c0_12, %c0_13] : memref<128x2xf32, #tpu.memory_space<vmem>>, vector<128x2xf32>
    %cst_14 = arith.constant dense<0.000000e+00> : vector<2x2xf32>
    %28 = tpu.matmul %26, %27, %cst_14 {dimension_numbers = #tpu.dot_dimension_numbers<[1], [0], [0], [1], [0, 0, 1, 1], [], []>} : vector<2x128xf32>, vector<128x2xf32>, vector<2x2xf32> -> vector<2x2xf32>
    %c0_15 = arith.constant 0 : index
    %c0_16 = arith.constant 0 : index
    %29 = vector.load %arg5[%c0_15, %c0_16] : memref<1x2xf32, #tpu.memory_space<vmem>>, vector<1x2xf32>
    %30 = vector.broadcast %29 : vector<1x2xf32> to vector<2x2xf32>
    %31 = arith.addf %28, %30 : vector<2x2xf32>
    %c0_17 = arith.constant 0 : index
    %c0_18 = arith.constant 0 : index
    %32 = vector.load %arg6[%c0_17, %c0_18] : memref<2x2xf32, #tpu.memory_space<vmem>>, vector<2x2xf32>
    tpu.vector_store %arg6[%c0_17, %c0_18], %31 {strides = array<i32>} : memref<2x2xf32, #tpu.memory_space<vmem>>, vector<2x2xf32>,
    return
  }
}

</mosaic_0001>

<llo_original>
// kernel: model_forward.1
$region0: #{model_forward.1}
  #allocation0 [shape = 'u32[]', space=smem, size = 0x4, offset = 0x4, fixed_abs, tag = 'smem constant byte address 0x4 - core index']
  #allocation1 [shape = 'u32[144,128]{1,0:T(1,128)}', space=vmem, size = 0x12000, scoped, tag = 'internal scratch']
  %s0 = inlined_call_operand.vmem [shape: s32[16,1], index: 0, kind: input, shape index: {}]
  %s1 = inlined_call_operand.vmem [shape: f32[128,16], index: 1, kind: input, shape index: {}]
  %s2 = inlined_call_operand.vmem [shape: f32[128,128], index: 2, kind: input, shape index: {}]
  %s3 = inlined_call_operand.vmem [shape: f32[1,128], index: 3, kind: input, shape index: {}]
  %s4 = inlined_call_operand.vmem [shape: f32[128,2], index: 4, kind: input, shape index: {}]
  %s5 = inlined_call_operand.vmem [shape: f32[1,2], index: 5, kind: input, shape index: {}]
  %s6 = inlined_call_operand.hbm [shape: f32[2,2], index: 6, kind: output, shape index: {}]
  %s7 = sld [smem:[#allocation0]]
  $region34: #{model_forward.1} parent=0
    _
  %s9 = ssub.s32 1, %s7
  %s10 = scalar_select 0, %s9, %s7
  $region1: #{model_forward.1} parent=0
    #allocation2 [shape = 'u8[1024]{0}', space=vmem, size = 0x400, scoped, tag = 'output window, operand 0, single buffered']
    #allocation3 [shape = 's32[1]{0}', space=sflag, size = 0x4, scoped, tag = 'scoped memory for model_forward.1']
    %11 = vsyncpa [#allocation3], 0
    // Predicated region
    $region2: #{model_forward.1} parent=1 // pred_check
      _
    $region3: #{model_forward.1} parent=1 // pred_check_branch
      %13 = sbr.rel (0) target = $region5
    $region4: #{model_forward.1} parent=1 // pred_region
      _
    $region5: #{model_forward.1} parent=1 // pred_fallthru
      _
    // Predicated region
    $region6: #{model_forward.1} parent=1 // pred_check
      _
    $region7: #{model_forward.1} parent=1 // pred_check_branch
      %15 = sbr.rel (0) target = $region9
    $region8: #{model_forward.1} parent=1 // pred_region
      _
    $region9: #{model_forward.1} parent=1 // pred_fallthru
      _
    // Predicated region
    $region10: #{model_forward.1} parent=1 // pred_check
      _
    $region11: #{model_forward.1} parent=1 // pred_check_branch
      %17 = sbr.rel (0) target = $region13
    $region12: #{model_forward.1} parent=1 // pred_region
      _
    $region13: #{model_forward.1} parent=1 // pred_fallthru
      _
    // Predicated region
    $region14: #{model_forward.1} parent=1 // pred_check
      _
    $region15: #{model_forward.1} parent=1 // pred_check_branch
      %19 = sbr.rel (0) target = $region17
    $region16: #{model_forward.1} parent=1 // pred_region
      _
    $region17: #{model_forward.1} parent=1 // pred_fallthru
      _
    // Predicated region
    $region18: #{model_forward.1} parent=1 // pred_check
      _
    $region19: #{model_forward.1} parent=1 // pred_check_branch
      %21 = sbr.rel (0) target = $region21
    $region20: #{model_forward.1} parent=1 // pred_region
      _
    $region21: #{model_forward.1} parent=1 // pred_fallthru
      _
    // Predicated region
    $region22: #{model_forward.1} parent=1 // pred_check
      _
    $region23: #{model_forward.1} parent=1 // pred_check_branch
      %23 = sbr.rel (0) target = $region25
    $region24: #{model_forward.1} parent=1 // pred_region
      _
    $region25: #{model_forward.1} parent=1 // pred_fallthru
      _
    %v24 = vld [vmem:[%s0] sm:$0xff]
    %v25 = vld [vmem:[%s0 + $0x8] sm:$0xff]
    %v26 = vlaneseq
    %v27 = vand.u32 %v26, 127
    %28 = vset.pattern.permute.xlu0 0
    %29 = vperm.xlu0 %28, %v24
    %v30 = vpop.permute.xlu0 %29
    %31 = vset.pattern.permute.xlu0 0
    %32 = vperm.xlu0 %31, %v25
    %v33 = vpop.permute.xlu0 %32
    %vm34 = vcmp.eq.s32.totalorder %v27, %v30
    %vm35 = vcmp.eq.s32.totalorder %v27, %v33
    %v36 = vsel %vm34, 1, 0
    %v37 = vsel %vm35, 1, 0
    %v38 = vcvt.s32.f32 %v36
    %v39 = vcvt.s32.f32 %v37
    %v40 = vld [vmem:[%s1] sm:$0xff]
    %v41 = vld [vmem:[%s1 + $0x8] sm:$0xff]
    %v42 = vld [vmem:[%s1 + $0x10] sm:$0xff]
    %v43 = vld [vmem:[%s1 + $0x18] sm:$0xff]
    %v44 = vld [vmem:[%s1 + $0x20] sm:$0xff]
    %v45 = vld [vmem:[%s1 + $0x28] sm:$0xff]
    %v46 = vld [vmem:[%s1 + $0x30] sm:$0xff]
    %v47 = vld [vmem:[%s1 + $0x38] sm:$0xff]
    %v48 = vld [vmem:[%s1 + $0x40] sm:$0xff]
    %v49 = vld [vmem:[%s1 + $0x48] sm:$0xff]
    %v50 = vld [vmem:[%s1 + $0x50] sm:$0xff]
    %v51 = vld [vmem:[%s1 + $0x58] sm:$0xff]
    %v52 = vld [vmem:[%s1 + $0x60] sm:$0xff]
    %v53 = vld [vmem:[%s1 + $0x68] sm:$0xff]
    %v54 = vld [vmem:[%s1 + $0x70] sm:$0xff]
    %v55 = vld [vmem:[%s1 + $0x78] sm:$0xff]
    %56 = vmatprep.subr.mxu0 0.0
    %57 = vmatpush1.msra.mxu0 %v40
    %58 = vmatprep.subr.mxu0 0.0
    %59 = vmatpush1.msra.mxu0 %v41
    %60 = vmatprep.subr.mxu0 0.0
    %61 = vmatpush1.msra.mxu0 %v42
    %62 = vmatprep.subr.mxu0 0.0
    %63 = vmatpush1.msra.mxu0 %v43
    %64 = vmatprep.subr.mxu0 0.0
    %65 = vmatpush1.msra.mxu0 %v44
    %66 = vmatprep.subr.mxu0 0.0
    %67 = vmatpush1.msra.mxu0 %v45
    %68 = vmatprep.subr.mxu0 0.0
    %69 = vmatpush1.msra.mxu0 %v46
    %70 = vmatprep.subr.mxu0 0.0
    %71 = vmatpush1.msra.mxu0 %v47
    %72 = vmatprep.subr.mxu0 0.0
    %73 = vmatpush1.msra.mxu0 %v48
    %74 = vmatprep.subr.mxu0 0.0
    %75 = vmatpush1.msra.mxu0 %v49
    %76 = vmatprep.subr.mxu0 0.0
    %77 = vmatpush1.msra.mxu0 %v50
    %78 = vmatprep.subr.mxu0 0.0
    %79 = vmatpush1.msra.mxu0 %v51
    %80 = vmatprep.subr.mxu0 0.0
    %81 = vmatpush1.msra.mxu0 %v52
    %82 = vmatprep.subr.mxu0 0.0
    %83 = vmatpush1.msra.mxu0 %v53
    %84 = vmatprep.subr.mxu0 0.0
    %85 = vmatpush1.msra.mxu0 %v54
    %86 = vmatprep.subr.mxu0 0.0
    %87 = vmatpush1.msra.mxu0 %v55
    %88 = vmatprep.subr.mxu0 0.0
    %89 = vmatpush1.msra.mxu0 0.0
    %90 = vmatprep.subr.mxu0 0.0
    %91 = vmatpush1.msra.mxu0 0.0
    %92 = vmatprep.subr.mxu0 0.0
    %93 = vmatpush1.msra.mxu0 0.0
    %94 = vmatprep.subr.mxu0 0.0
    %95 = vmatpush1.msra.mxu0 0.0
    %96 = vmatprep.subr.mxu0 0.0
    %97 = vmatpush1.msra.mxu0 0.0
    %98 = vmatprep.subr.mxu0 0.0
    %99 = vmatpush1.msra.mxu0 0.0
    %100 = vmatprep.subr.mxu0 0.0
    %101 = vmatpush1.msra.mxu0 0.0
    %102 = vmatprep.subr.mxu0 0.0
    %103 = vmatpush1.msra.mxu0 0.0
    %104 = vmatprep.subr.mxu0 0.0
    %105 = vmatpush1.msra.mxu0 0.0
    %106 = vmatprep.subr.mxu0 0.0
    %107 = vmatpush1.msra.mxu0 0.0
    %108 = vmatprep.subr.mxu0 0.0
    %109 = vmatpush1.msra.mxu0 0.0
    %110 = vmatprep.subr.mxu0 0.0
    %111 = vmatpush1.msra.mxu0 0.0
    %112 = vmatprep.subr.mxu0 0.0
    %113 = vmatpush1.msra.mxu0 0.0
    %114 = vmatprep.subr.mxu0 0.0
    %115 = vmatpush1.msra.mxu0 0.0
    %116 = vmatprep.subr.mxu0 0.0
    %117 = vmatpush1.msra.mxu0 0.0
    %118 = vmatprep.subr.mxu0 0.0
    %119 = vmatpush1.msra.mxu0 0.0
    %120 = vmatprep.mubr.f32.mxu0 0.0
    %121 = vmatmul.mubr.f32.gmra.mrb[0].mxu0 %v38
    %v122 = vpop.f32.mrb[0].mxu0
    %v123 = vadd.f32 0.0, %v122
    %v124 = vpop.f32.mrb[0].mxu0
    %125 = vmatprep.mubr.f32.mxu0 0.0
    %126 = vmatmul.mubr.f32.gmra.mrb[0].mxu0 %v39
    %v127 = vpop.f32.mrb[0].mxu0
    %v128 = vadd.f32 0.0, %v127
    %v129 = vpop.f32.mrb[0].mxu0
    %130 = vdwg.mxu0
    %vm134 = vcmask 1046528
    %v135 = vrot.slane %v123, 1
    %v136 = vrot.slane %v128, 1
    %v137 = vsel %vm134, %v135, %v136
    %v138 = vrot.slane 0.0, 1
    %v139 = vsel %vm134, %v136, %v138
    %140 = vrot.lane.b32.xlu0 %v137, 16
    %v141 = vpop.permute.xlu0 %140
    %142 = vrot.lane.b32.xlu0 %v139, 16
    %v143 = vpop.permute.xlu0 %142
    %vm146 = vcmask 1045504
    %v147 = vrot.slane %v123, 2
    %v148 = vrot.slane %v128, 2
    %v149 = vsel %vm146, %v147, %v148
    %v150 = vrot.slane 0.0, 2
    %v151 = vsel %vm146, %v148, %v150
    %152 = vrot.lane.b32.xlu0 %v149, 32
    %v153 = vpop.permute.xlu0 %152
    %154 = vrot.lane.b32.xlu0 %v151, 32
    %v155 = vpop.permute.xlu0 %154
    %vm158 = vcmask 1044480
    %v159 = vrot.slane %v123, 3
    %v160 = vrot.slane %v128, 3
    %v161 = vsel %vm158, %v159, %v160
    %v162 = vrot.slane 0.0, 3
    %v163 = vsel %vm158, %v160, %v162
    %164 = vrot.lane.b32.xlu0 %v161, 48
    %v165 = vpop.permute.xlu0 %164
    %166 = vrot.lane.b32.xlu0 %v163, 48
    %v167 = vpop.permute.xlu0 %166
    %vm170 = vcmask 1043456
    %v171 = vrot.slane %v123, 4
    %v172 = vrot.slane %v128, 4
    %v173 = vsel %vm170, %v171, %v172
    %v174 = vrot.slane 0.0, 4
    %v175 = vsel %vm170, %v172, %v174
    %176 = vrot.lane.b32.xlu0 %v173, 64
    %v177 = vpop.permute.xlu0 %176
    %178 = vrot.lane.b32.xlu0 %v175, 64
    %v179 = vpop.permute.xlu0 %178
    %vm182 = vcmask 130048
    %v183 = vsel %vm182, %v123, %v141
    %v184 = vsel %vm182, %v128, %v143
    %vm185 = vcmask 261120
    %v186 = vsel %vm185, %v183, %v153
    %v187 = vsel %vm185, %v184, %v155
    %vm188 = vcmask 392192
    %v189 = vsel %vm188, %v186, %v165
    %v190 = vsel %vm188, %v187, %v167
    %vm191 = vcmask 523264
    %v192 = vsel %vm191, %v189, %v177
    %v193 = vsel %vm191, %v190, %v179
    %vm194 = vcmask 654336
    %v195 = vsel %vm194, %v192, 0.0
    %v196 = vsel %vm194, %v193, 0.0
    %v197 = vld [vmem:[%s2] sm:$0xff]
    %v198 = vld [vmem:[%s2 + $0x8] sm:$0xff]
    %v199 = vld [vmem:[%s2 + $0x10] sm:$0xff]
    %v200 = vld [vmem:[%s2 + $0x18] sm:$0xff]
    %v201 = vld [vmem:[%s2 + $0x20] sm:$0xff]
    %v202 = vld [vmem:[%s2 + $0x28] sm:$0xff]
    %v203 = vld [vmem:[%s2 + $0x30] sm:$0xff]
    %v204 = vld [vmem:[%s2 + $0x38] sm:$0xff]
    %v205 = vld [vmem:[%s2 + $0x40] sm:$0xff]
    %v206 = vld [vmem:[%s2 + $0x48] sm:$0xff]
    %v207 = vld [vmem:[%s2 + $0x50] sm:$0xff]
    %v208 = vld [vmem:[%s2 + $0x58] sm:$0xff]
    %v209 = vld [vmem:[%s2 + $0x60] sm:$0xff]
    %v210 = vld [vmem:[%s2 + $0x68] sm:$0xff]
    %v211 = vld [vmem:[%s2 + $0x70] sm:$0xff]
    %v212 = vld [vmem:[%s2 + $0x78] sm:$0xff]
    %v213 = vld [vmem:[%s3] sm:$0x1]
    %v215 = vlaneseq
    %v216 = vshrl.u32 %v215, 7
    %v217 = vsub.s32 0, %v216
    %v218 = vrot.slane %v213, %v217
    %220 = vmatprep.subr.mxu0 0.0
    %221 = vmatpush1.msra.mxu0 %v197
    %222 = vmatprep.subr.mxu0 0.0
    %223 = vmatpush1.msra.mxu0 %v198
    %224 = vmatprep.subr.mxu0 0.0
    %225 = vmatpush1.msra.mxu0 %v199
    %226 = vmatprep.subr.mxu0 0.0
    %227 = vmatpush1.msra.mxu0 %v200
    %228 = vmatprep.subr.mxu0 0.0
    %229 = vmatpush1.msra.mxu0 %v201
    %230 = vmatprep.subr.mxu0 0.0
    %231 = vmatpush1.msra.mxu0 %v202
    %232 = vmatprep.subr.mxu0 0.0
    %233 = vmatpush1.msra.mxu0 %v203
    %234 = vmatprep.subr.mxu0 0.0
    %235 = vmatpush1.msra.mxu0 %v204
    %236 = vmatprep.subr.mxu0 0.0
    %237 = vmatpush1.msra.mxu0 %v205
    %238 = vmatprep.subr.mxu0 0.0
    %239 = vmatpush1.msra.mxu0 %v206
    %240 = vmatprep.subr.mxu0 0.0
    %241 = vmatpush1.msra.mxu0 %v207
    %242 = vmatprep.subr.mxu0 0.0
    %243 = vmatpush1.msra.mxu0 %v208
    %244 = vmatprep.subr.mxu0 0.0
    %245 = vmatpush1.msra.mxu0 %v209
    %246 = vmatprep.subr.mxu0 0.0
    %247 = vmatpush1.msra.mxu0 %v210
    %248 = vmatprep.subr.mxu0 0.0
    %249 = vmatpush1.msra.mxu0 %v211
    %250 = vmatprep.subr.mxu0 0.0
    %251 = vmatpush1.msra.mxu0 %v212
    %252 = vmatprep.subr.mxu0 0.0
    %253 = vmatpush1.msra.mxu0 0.0
    %254 = vmatprep.subr.mxu0 0.0
    %255 = vmatpush1.msra.mxu0 0.0
    %256 = vmatprep.subr.mxu0 0.0
    %257 = vmatpush1.msra.mxu0 0.0
    %258 = vmatprep.subr.mxu0 0.0
    %259 = vmatpush1.msra.mxu0 0.0
    %260 = vmatprep.subr.mxu0 0.0
    %261 = vmatpush1.msra.mxu0 0.0
    %262 = vmatprep.subr.mxu0 0.0
    %263 = vmatpush1.msra.mxu0 0.0
    %264 = vmatprep.subr.mxu0 0.0
    %265 = vmatpush1.msra.mxu0 0.0
    %266 = vmatprep.subr.mxu0 0.0
    %267 = vmatpush1.msra.mxu0 0.0
    %268 = vmatprep.subr.mxu0 0.0
    %269 = vmatpush1.msra.mxu0 0.0
    %270 = vmatprep.subr.mxu0 0.0
    %271 = vmatpush1.msra.mxu0 0.0
    %272 = vmatprep.subr.mxu0 0.0
    %273 = vmatpush1.msra.mxu0 0.0
    %274 = vmatprep.subr.mxu0 0.0
    %275 = vmatpush1.msra.mxu0 0.0
    %276 = vmatprep.subr.mxu0 0.0
    %277 = vmatpush1.msra.mxu0 0.0
    %278 = vmatprep.subr.mxu0 0.0
    %279 = vmatpush1.msra.mxu0 0.0
    %280 = vmatprep.subr.mxu0 0.0
    %281 = vmatpush1.msra.mxu0 0.0
    %282 = vmatprep.subr.mxu0 0.0
    %283 = vmatpush1.msra.mxu0 0.0
    %284 = vmatprep.mubr.f32.mxu0 0.0
    %285 = vmatmul.mubr.f32.gmra.mrb[0].mxu0 %v195
    %v286 = vpop.f32.mrb[0].mxu0
    %v287 = vadd.f32 %v218, %v286
    %v288 = vpop.f32.mrb[0].mxu0
    %289 = vmatprep.mubr.f32.mxu0 0.0
    %290 = vmatmul.mubr.f32.gmra.mrb[0].mxu0 %v196
    %v291 = vpop.f32.mrb[0].mxu0
    %v292 = vadd.f32 %v218, %v291
    %v293 = vpop.f32.mrb[0].mxu0
    %294 = vdwg.mxu0
    %v295 = vmax.f32 %v287, 0.0
    %v296 = vmax.f32 %v292, 0.0
    %v297 = vsel %vm170, %v295, -inf
    %v298 = vrot.slane %v297, 4
    %v299 = vmax.f32 %v297, %v298
    %v300 = vrot.slane %v299, 2
    %v301 = vmax.f32 %v299, %v300
    %v302 = vrot.slane %v301, 1
    %v303 = vmax.f32 %v301, %v302
    %v304 = vsel %vm170, %v296, -inf
    %v305 = vrot.slane %v304, 4
    %v306 = vmax.f32 %v304, %v305
    %v307 = vrot.slane %v306, 2
    %v308 = vmax.f32 %v306, %v307
    %v309 = vrot.slane %v308, 1
    %v310 = vmax.f32 %v308, %v309
    %v311 = vld [vmem:[%s4] sm:$0xff]
    %v312 = vld [vmem:[%s4 + $0x8] sm:$0xff]
    %v313 = vld [vmem:[%s4 + $0x10] sm:$0xff]
    %v314 = vld [vmem:[%s4 + $0x18] sm:$0xff]
    %v315 = vld [vmem:[%s4 + $0x20] sm:$0xff]
    %v316 = vld [vmem:[%s4 + $0x28] sm:$0xff]
    %v317 = vld [vmem:[%s4 + $0x30] sm:$0xff]
    %v318 = vld [vmem:[%s4 + $0x38] sm:$0xff]
    %v319 = vld [vmem:[%s4 + $0x40] sm:$0xff]
    %v320 = vld [vmem:[%s4 + $0x48] sm:$0xff]
    %v321 = vld [vmem:[%s4 + $0x50] sm:$0xff]
    %v322 = vld [vmem:[%s4 + $0x58] sm:$0xff]
    %v323 = vld [vmem:[%s4 + $0x60] sm:$0xff]
    %v324 = vld [vmem:[%s4 + $0x68] sm:$0xff]
    %v325 = vld [vmem:[%s4 + $0x70] sm:$0xff]
    %v326 = vld [vmem:[%s4 + $0x78] sm:$0xff]
    %v327 = vld [vmem:[%s5] sm:$0x1]
    %v329 = vlaneseq
    %v330 = vshrl.u32 %v329, 7
    %v331 = vsub.s32 0, %v330
    %v332 = vrot.slane %v327, %v331
    %vm336 = vcmask 1041409
    %v337 = vsel %vm336, %v310, %v303
    %339 = vmatprep.subr.mxu0 0.0
    %340 = vmatpush1.msra.mxu0 %v311
    %341 = vmatprep.subr.mxu0 0.0
    %342 = vmatpush1.msra.mxu0 %v312
    %343 = vmatprep.subr.mxu0 0.0
    %344 = vmatpush1.msra.mxu0 %v313
    %345 = vmatprep.subr.mxu0 0.0
    %346 = vmatpush1.msra.mxu0 %v314
    %347 = vmatprep.subr.mxu0 0.0
    %348 = vmatpush1.msra.mxu0 %v315
    %349 = vmatprep.subr.mxu0 0.0
    %350 = vmatpush1.msra.mxu0 %v316
    %351 = vmatprep.subr.mxu0 0.0
    %352 = vmatpush1.msra.mxu0 %v317
    %353 = vmatprep.subr.mxu0 0.0
    %354 = vmatpush1.msra.mxu0 %v318
    %355 = vmatprep.subr.mxu0 0.0
    %356 = vmatpush1.msra.mxu0 %v319
    %357 = vmatprep.subr.mxu0 0.0
    %358 = vmatpush1.msra.mxu0 %v320
    %359 = vmatprep.subr.mxu0 0.0
    %360 = vmatpush1.msra.mxu0 %v321
    %361 = vmatprep.subr.mxu0 0.0
    %362 = vmatpush1.msra.mxu0 %v322
    %363 = vmatprep.subr.mxu0 0.0
    %364 = vmatpush1.msra.mxu0 %v323
    %365 = vmatprep.subr.mxu0 0.0
    %366 = vmatpush1.msra.mxu0 %v324
    %367 = vmatprep.subr.mxu0 0.0
    %368 = vmatpush1.msra.mxu0 %v325
    %369 = vmatprep.subr.mxu0 0.0
    %370 = vmatpush1.msra.mxu0 %v326
    %371 = vmatprep.subr.mxu0 0.0
    %372 = vmatpush1.msra.mxu0 0.0
    %373 = vmatprep.subr.mxu0 0.0
    %374 = vmatpush1.msra.mxu0 0.0
    %375 = vmatprep.subr.mxu0 0.0
    %376 = vmatpush1.msra.mxu0 0.0
    %377 = vmatprep.subr.mxu0 0.0
    %378 = vmatpush1.msra.mxu0 0.0
    %379 = vmatprep.subr.mxu0 0.0
    %380 = vmatpush1.msra.mxu0 0.0
    %381 = vmatprep.subr.mxu0 0.0
    %382 = vmatpush1.msra.mxu0 0.0
    %383 = vmatprep.subr.mxu0 0.0
    %384 = vmatpush1.msra.mxu0 0.0
    %385 = vmatprep.subr.mxu0 0.0
    %386 = vmatpush1.msra.mxu0 0.0
    %387 = vmatprep.subr.mxu0 0.0
    %388 = vmatpush1.msra.mxu0 0.0
    %389 = vmatprep.subr.mxu0 0.0
    %390 = vmatpush1.msra.mxu0 0.0
    %391 = vmatprep.subr.mxu0 0.0
    %392 = vmatpush1.msra.mxu0 0.0
    %393 = vmatprep.subr.mxu0 0.0
    %394 = vmatpush1.msra.mxu0 0.0
    %395 = vmatprep.subr.mxu0 0.0
    %396 = vmatpush1.msra.mxu0 0.0
    %397 = vmatprep.subr.mxu0 0.0
    %398 = vmatpush1.msra.mxu0 0.0
    %399 = vmatprep.subr.mxu0 0.0
    %400 = vmatpush1.msra.mxu0 0.0
    %401 = vmatprep.subr.mxu0 0.0
    %402 = vmatpush1.msra.mxu0 0.0
    %403 = vmatprep.mubr.f32.mxu0 0.0
    %404 = vmatmul.mubr.f32.gmra.mrb[0].mxu0 %v337
    %v405 = vpop.f32.mrb[0].mxu0
    %v406 = vadd.f32 %v332, %v405
    %v407 = vpop.f32.mrb[0].mxu0
    %408 = vdwg.mxu0
    %vm409 = vcmask 9216
    %410 = vst.msk [vmem:[#allocation2] sm:$0x3] %vm409, %v406
    // Predicated region
    $region26: #{model_forward.1} parent=1 // pred_check
      _
    $region27: #{model_forward.1} parent=1 // pred_check_branch
      %412 = sbr.rel (0) target = $region29
    $region28: #{model_forward.1} parent=1 // pred_region
      %s414 = ssub.s32 32, 32
      %415 = vsyncadd [#allocation3], %s414
      %s417 = sshll.u32 [#allocation2], 4
      %s418 = int_to_ptr.vmem [resolvable:$true] %s417
      %420 = dma.vmem_to_hbm [thread:$0]  %s418, 32, %s6, [#allocation3]
    $region29: #{model_forward.1} parent=1 // pred_fallthru
      _
    // Predicated region
    $region30: #{model_forward.1} parent=1 // pred_check
      _
    $region31: #{model_forward.1} parent=1 // pred_check_branch
      %422 = sbr.rel (0) target = $region33
    $region32: #{model_forward.1} parent=1 // pred_region
      %423 = dma.done [#allocation3], 32
    $region33: #{model_forward.1} parent=1 // pred_fallthru
      _
    %424 = vsyncpa [#allocation3], 1

</llo_original>
